<compile_context>
chip_gen: v6e
topology: v6e:2x2x1
jax: 0.10.0
libtpu: 0.0.40
codegen_flags: <defaults>
</compile_context>

<pallas_src>
import jax
import jax.numpy as jnp
from jax import lax
from jax.experimental import pallas as pl
from jax.experimental.pallas import tpu as pltpu


def _round_up(x, m):
    return (x + m - 1) // m * m


# ---------------------------------------------------------------------------
# Kernel
# ---------------------------------------------------------------------------
def make_simplex_kernel(n_mats, compute_dtype, tile_rows, row_sub):
    """Fused MLP + log-softmax kernel for one (tile_rows, d_in_p) batch tile."""

    def kernel(*refs):
        x_ref = refs[0]
        w_refs = refs[1:1 + n_mats]
        b_refs = refs[1 + n_mats:1 + 2 * n_mats]
        probs_ref = refs[1 + 2 * n_mats]
        logprobs_ref = refs[2 + 2 * n_mats]

        def tile_fwd(x):
            h = x
            for i in range(n_mats):
                lhs = h if h.dtype == compute_dtype else h.astype(compute_dtype)
                h = jnp.dot(lhs, w_refs[i][...],
                            preferred_element_type=jnp.float32)
                h = h + b_refs[i][...]            # f32 bias -> f32 activations
                if i < n_mats - 1:
                    h = jnp.maximum(h, 0.0)       # hidden-layer ReLU
            # Numerically-stable log-softmax.  probs = exp(logprobs) exactly,
            # matching the torch module and summing to 1 within f32 rounding.
            m = jnp.max(h, axis=-1, keepdims=True)
            z = h - m
            s = jnp.sum(jnp.exp(z), axis=-1, keepdims=True)
            lp = z - jnp.log(s)
            return jnp.exp(lp), lp

        if row_sub is None:
            p, lp = tile_fwd(x_ref[...])
            probs_ref[...] = p
            logprobs_ref[...] = lp
        else:
            # Row sub-tiling for big batch tiles: keep h/z/exp small so they
            # stay in vregs instead of round-tripping VMEM between fused ops.
            def body(r, carry):
                row = pl.multiple_of(r * row_sub, row_sub)
                p, lp = tile_fwd(x_ref[pl.ds(row, row_sub), :])
                probs_ref[pl.ds(row, row_sub), :] = p
                logprobs_ref[pl.ds(row, row_sub), :] = lp
                return carry

            lax.fori_loop(0, tile_rows // row_sub, body, 0)

    return kernel


# ---------------------------------------------------------------------------
# One-time parameter preparation (hoisted out of the forward path)
# ---------------------------------------------------------------------------
def prepare_params(weights, biases, compute_dtype=jnp.bfloat16):
    """Pads contraction dims to the layout sublane multiple (8 f32 / 16 bf16),
    leaves the output dim unpadded, and casts weights to the compute dtype.
    Zero padding is exact: padded inputs / hidden units are 0 and ReLU(0)=0."""
    compute_dtype = jnp.dtype(compute_dtype)
    k_align = 16 if compute_dtype == jnp.dtype(jnp.bfloat16) else 8
    dims = [weights[0].shape[0]] + [w.shape[1] for w in weights]
    dims_p = [_round_up(d, k_align) for d in dims[:-1]] + [dims[-1]]

    w_p, b_p = [], []
    for i, (w, b) in enumerate(zip(weights, biases)):
        w = jnp.pad(w, ((0, dims_p[i] - dims[i]),
                        (0, dims_p[i + 1] - dims[i + 1])))
        b = jnp.pad(jnp.reshape(b, (1, -1)),
                    ((0, 0), (0, dims_p[i + 1] - dims[i + 1])))
        w_p.append(jnp.asarray(w, compute_dtype))
        b_p.append(jnp.asarray(b, jnp.float32))   # biases stay f32
    return dict(weights=tuple(w_p), biases=tuple(b_p),
                d_in=dims[0], d_out=dims[-1], compute_dtype=compute_dtype)


# ---------------------------------------------------------------------------
# Forward wrapper
# ---------------------------------------------------------------------------
def _const_spec(shape, single_buffer):
    index_map = lambda *_: (0,) * len(shape)
    if single_buffer and hasattr(pl, "Buffered"):
        try:
            # Constant index_map -> the block never changes; single-buffer so
            # resident params don't take 2x VMEM (matters on v7x's 64 MiB).
            return pl.BlockSpec(shape, index_map, pipeline_mode=pl.Buffered(1))
        except Exception:
            pass
    return pl.BlockSpec(shape, index_map)


def simplex_net_forward(phi, params, *, tile_b=1024):
    """phi: (B, d_in) f32.  Returns (probs, logprobs), each (B, d_out) f32."""
    weights, biases = params["weights"], params["biases"]
    compute_dtype = params["compute_dtype"]
    d_in, d_out = params["d_in"], params["d_out"]
    n_mats = len(weights)
    d_in_p = weights[0].shape[0]

    B = phi.shape[0]
    assert phi.shape[1] == d_in

    SUB = 8
    MIN_GRID_STEPS = 4        # give v7x's two TensorCores a grid to shard
    TB = min(_round_up(tile_b, SUB),
             max(SUB, _round_up(pl.cdiv(B, MIN_GRID_STEPS), SUB)))
    B_p = _round_up(B, TB)
    grid = (B_p // TB,)

    x = phi                    # kept f32; cast to compute dtype inside kernel
    if (B_p, d_in_p) != (B, d_in):
        x = jnp.pad(x, ((0, B_p - B), (0, d_in_p - d_in)))

    ROW_SUB = 256
    row_sub = ROW_SUB if (TB >= 2 * ROW_SUB and TB % ROW_SUB == 0) else None

    kernel = make_simplex_kernel(n_mats, compute_dtype, TB, row_sub)

    x_spec = pl.BlockSpec((TB, d_in_p), lambda i: (i, 0))
    out_spec = pl.BlockSpec((TB, d_out), lambda i: (i, 0))
    out_shape = (jax.ShapeDtypeStruct((B_p, d_out), jnp.float32),
                 jax.ShapeDtypeStruct((B_p, d_out), jnp.float32))

    # Roofline hints + explicit VMEM budget (scoped default is only 16/32 MiB).
    w_bytes = int(sum(w.size * w.dtype.itemsize for w in weights))
    b_bytes = int(sum(b.size * 4 for b in biases))
    flops = int(2 * B_p * sum(w.shape[0] * w.shape[1] for w in weights))
    transcendentals = int(B_p * (2 * d_out + 1))
    bytes_accessed = int(B_p * d_in_p * 4 + w_bytes + b_bytes
                         + 2 * B_p * d_out * 4)
    widest = max([d_in_p] + [w.shape[1] for w in weights])
    vmem_need = (2 * TB * d_in_p * 4            # input block, double-buffered
                 + 2 * 2 * TB * d_out * 4       # two outputs, double-buffered
                 + 2 * (w_bytes + b_bytes)      # params (worst case 2 buffers)
                 + 2 * TB * widest * 4)         # live intermediates
    vmem_limit = int(min(64 * 2 ** 20, max(2 * vmem_need, 16 * 2 ** 20)))

    def run(single_buffer_params):
        w_specs = [_const_spec(w.shape, single_buffer_params) for w in weights]
        b_specs = [_const_spec(b.shape, single_buffer_params) for b in biases]
        return pl.pallas_call(
            kernel,
            grid=grid,
            in_specs=[x_spec] + w_specs + b_specs,
            out_specs=(out_spec, out_spec),
            out_shape=out_shape,
            compiler_params=pltpu.CompilerParams(
                dimension_semantics=("parallel",),
                vmem_limit_bytes=vmem_limit),
            cost_estimate=pl.CostEstimate(flops=flops,
                                          transcendentals=transcendentals,
                                          bytes_accessed=bytes_accessed),
        )(x, *weights, *biases)

    try:
        probs_p, logprobs_p = run(True)
    except Exception:
        # Fallback if Buffered(1) single-buffering is rejected by this version.
        probs_p, logprobs_p = run(False)

    if B_p != B:
        return probs_p[:B], logprobs_p[:B]
    return probs_p, logprobs_p


# ---------------------------------------------------------------------------
# Parameter init + pure-JAX reference
# ---------------------------------------------------------------------------
def init_params(key, d_in, d_hid, d_out, n_layers):
    """Deterministic Linear-layer init (uniform fan-in, like torch)."""
    dims = [d_in] + [d_hid] * n_layers + [d_out]
    weights, biases = [], []
    for i in range(len(dims) - 1):
        key, wk, bk = jax.random.split(key, 3)
        bound = 1.0 / (dims[i] ** 0.5)
        weights.append(jax.random.uniform(wk, (dims[i], dims[i + 1]),
                                          jnp.float32, -bound, bound))
        biases.append(jax.random.uniform(bk, (1, dims[i + 1]),
                                         jnp.float32, -bound, bound))
    return weights, biases


def _reference(phi, weights, biases):
    h = phi
    for i in range(len(weights)):
        h = h @ weights[i] + biases[i]
        if i < len(weights) - 1:
            h = jnp.maximum(h, 0.0)
    logprobs = jax.nn.log_softmax(h, axis=-1)
    return jnp.exp(logprobs), logprobs


if __name__ == "__main__":
    B, d_in, d_hid, d_out, n_layers = 8, 32, 32, 16, 2

    key = jax.random.PRNGKey(0)
    key, xk = jax.random.split(key)
    phi = jax.random.normal(xk, (B, d_in), dtype=jnp.float32)
    weights, biases = init_params(key, d_in, d_hid, d_out, n_layers)
    ref_probs, ref_logprobs = _reference(phi, weights, biases)

    # One-time parameter prep (hoisted out of the forward path).
    params_f32 = prepare_params(weights, biases, compute_dtype=jnp.float32)
    params_bf16 = prepare_params(weights, biases)          # bf16 default

    # 1) f32 path, single grid step.
    probs, logprobs = simplex_net_forward(phi, params_f32)
    probs = jax.block_until_ready(probs)
    logprobs = jax.block_until_ready(logprobs)
    assert probs.shape == (B, d_out) and logprobs.shape == (B, d_out)
    assert jnp.allclose(logprobs, ref_logprobs, atol=2e-3), "logprobs mismatch (f32)"
    assert jnp.allclose(probs, ref_probs, atol=2e-3), "probs mismatch (f32)"
    assert jnp.allclose(probs, jnp.exp(logprobs), atol=1e-6), "probs != exp(logprobs)"
    assert jnp.allclose(jnp.sum(probs, axis=-1), 1.0, atol=1e-4), "not a simplex"

    # 2) multi-step grid + remainder-row padding (B not a multiple of the tile).
    B2 = 20
    key, xk2 = jax.random.split(key)
    phi2 = jax.random.normal(xk2, (B2, d_in), dtype=jnp.float32)
    rp2, rl2 = _reference(phi2, weights, biases)
    probs2, logprobs2 = simplex_net_forward(phi2, params_f32, tile_b=16)
    jax.block_until_ready(logprobs2)
    assert logprobs2.shape == (B2, d_out)
    assert jnp.allclose(logprobs2, rl2, atol=2e-3), "logprobs mismatch (tiled)"
    assert jnp.allclose(probs2, rp2, atol=2e-3), "probs mismatch (tiled)"
    assert jnp.allclose(jnp.sum(probs2, axis=-1), 1.0, atol=1e-4), "not a simplex (tiled)"

    # 3) large batch: >=4 grid steps (v7x megacore) + in-kernel row sub-tiling.
    B3 = 2048
    key, xk3 = jax.random.split(key)
    phi3 = jax.random.normal(xk3, (B3, d_in), dtype=jnp.float32)
    rp3, rl3 = _reference(phi3, weights, biases)
    probs3, logprobs3 = simplex_net_forward(phi3, params_f32)
    jax.block_until_ready(logprobs3)
    assert logprobs3.shape == (B3, d_out)
    assert jnp.allclose(logprobs3, rl3, atol=2e-3), "logprobs mismatch (subtiled)"
    assert jnp.allclose(jnp.sum(probs3, axis=-1), 1.0, atol=1e-4), "not a simplex (subtiled)"

    # 4) bf16 default path (v6e/v7x fast path) — looser tolerance vs f32 ref.
    probs_bf, logprobs_bf = simplex_net_forward(phi, params_bf16)
    jax.block_until_ready(logprobs_bf)
    assert jnp.allclose(logprobs_bf, ref_logprobs, atol=1.5e-1), "logprobs mismatch (bf16)"
    assert jnp.allclose(probs_bf, ref_probs, atol=5e-2), "probs mismatch (bf16)"
    assert jnp.allclose(jnp.sum(probs_bf, axis=-1), 1.0, atol=1e-4), "not a simplex (bf16)"

    print("KERNEL_OK")
</pallas_src>

<mosaic_0001>
module attributes {stable_mosaic.version = 11 : i64} {
  func.func @kernel(%arg0: i32, %arg1: memref<8x32xf32, #tpu.memory_space<vmem>>, %arg2: memref<32x32xf32, #tpu.memory_space<vmem>>, %arg3: memref<32x32xf32, #tpu.memory_space<vmem>>, %arg4: memref<32x16xf32, #tpu.memory_space<vmem>>, %arg5: memref<1x32xf32, #tpu.memory_space<vmem>>, %arg6: memref<1x32xf32, #tpu.memory_space<vmem>>, %arg7: memref<1x16xf32, #tpu.memory_space<vmem>>, %arg8: memref<8x16xf32, #tpu.memory_space<vmem>>, %arg9: memref<8x16xf32, #tpu.memory_space<vmem>>) attributes {dimension_semantics = [#tpu.dimension_semantics<parallel>], iteration_bounds = array<i64: 1>, scalar_prefetch = 0 : i64, scratch_operands = 0 : i64, tpu.core_type = #tpu.core_type<tc>, window_params = [{transform_indices = @transform_0, window_bounds = array<i64: 8, 32>}, {pipeline_mode = #tpu.pipeline_mode<synchronous>, transform_indices = @transform_1, window_bounds = array<i64: 32, 32>}, {pipeline_mode = #tpu.pipeline_mode<synchronous>, transform_indices = @transform_2, window_bounds = array<i64: 32, 32>}, {pipeline_mode = #tpu.pipeline_mode<synchronous>, transform_indices = @transform_3, window_bounds = array<i64: 32, 16>}, {pipeline_mode = #tpu.pipeline_mode<synchronous>, transform_indices = @transform_4, window_bounds = array<i64: 1, 32>}, {pipeline_mode = #tpu.pipeline_mode<synchronous>, transform_indices = @transform_5, window_bounds = array<i64: 1, 32>}, {pipeline_mode = #tpu.pipeline_mode<synchronous>, transform_indices = @transform_6, window_bounds = array<i64: 1, 16>}, {transform_indices = @transform_7, window_bounds = array<i64: 8, 16>}, {transform_indices = @transform_8, window_bounds = array<i64: 8, 16>}]} {
    %c0 = arith.constant 0 : index
    %c0_0 = arith.constant 0 : index
    %0 = vector.load %arg1[%c0, %c0_0] : memref<8x32xf32, #tpu.memory_space<vmem>>, vector<8x32xf32>
    %c0_1 = arith.constant 0 : index
    %c0_2 = arith.constant 0 : index
    %1 = vector.load %arg2[%c0_1, %c0_2] : memref<32x32xf32, #tpu.memory_space<vmem>>, vector<32x32xf32>
    %cst = arith.constant dense<0.000000e+00> : vector<8x32xf32>
    %2 = tpu.matmul %0, %1, %cst {dimension_numbers = #tpu.dot_dimension_numbers<[1], [0], [0], [1], [0, 0, 1, 1], [], []>} : vector<8x32xf32>, vector<32x32xf32>, vector<8x32xf32> -> vector<8x32xf32>
    %c0_3 = arith.constant 0 : index
    %c0_4 = arith.constant 0 : index
    %3 = vector.load %arg5[%c0_3, %c0_4] : memref<1x32xf32, #tpu.memory_space<vmem>>, vector<1x32xf32>
    %4 = vector.broadcast %3 : vector<1x32xf32> to vector<8x32xf32>
    %5 = arith.addf %2, %4 : vector<8x32xf32>
    %cst_5 = arith.constant 0.000000e+00 : f32
    %6 = vector.broadcast %cst_5 : f32 to vector<8x32xf32>
    %7 = arith.maximumf %5, %6 : vector<8x32xf32>
    %c0_6 = arith.constant 0 : index
    %c0_7 = arith.constant 0 : index
    %8 = vector.load %arg3[%c0_6, %c0_7] : memref<32x32xf32, #tpu.memory_space<vmem>>, vector<32x32xf32>
    %cst_8 = arith.constant dense<0.000000e+00> : vector<8x32xf32>
    %9 = tpu.matmul %7, %8, %cst_8 {dimension_numbers = #tpu.dot_dimension_numbers<[1], [0], [0], [1], [0, 0, 1, 1], [], []>} : vector<8x32xf32>, vector<32x32xf32>, vector<8x32xf32> -> vector<8x32xf32>
    %c0_9 = arith.constant 0 : index
    %c0_10 = arith.constant 0 : index
    %10 = vector.load %arg6[%c0_9, %c0_10] : memref<1x32xf32, #tpu.memory_space<vmem>>, vector<1x32xf32>
    %11 = vector.broadcast %10 : vector<1x32xf32> to vector<8x32xf32>
    %12 = arith.addf %9, %11 : vector<8x32xf32>
    %cst_11 = arith.constant 0.000000e+00 : f32
    %13 = vector.broadcast %cst_11 : f32 to vector<8x32xf32>
    %14 = arith.maximumf %12, %13 : vector<8x32xf32>
    %c0_12 = arith.constant 0 : index
    %c0_13 = arith.constant 0 : index
    %15 = vector.load %arg4[%c0_12, %c0_13] : memref<32x16xf32, #tpu.memory_space<vmem>>, vector<32x16xf32>
    %cst_14 = arith.constant dense<0.000000e+00> : vector<8x16xf32>
    %16 = tpu.matmul %14, %15, %cst_14 {dimension_numbers = #tpu.dot_dimension_numbers<[1], [0], [0], [1], [0, 0, 1, 1], [], []>} : vector<8x32xf32>, vector<32x16xf32>, vector<8x16xf32> -> vector<8x16xf32>
    %c0_15 = arith.constant 0 : index
    %c0_16 = arith.constant 0 : index
    %17 = vector.load %arg7[%c0_15, %c0_16] : memref<1x16xf32, #tpu.memory_space<vmem>>, vector<1x16xf32>
    %18 = vector.broadcast %17 : vector<1x16xf32> to vector<8x16xf32>
    %19 = arith.addf %16, %18 : vector<8x16xf32>
    %cst_17 = arith.constant dense<0xFF800000> : vector<8xf32>
    %20 = vector.multi_reduction <maximumf>, %19, %cst_17 [1] : vector<8x16xf32> to vector<8xf32>
    %21 = vector.shape_cast %20 : vector<8xf32> to vector<8x1xf32>
    %22 = vector.broadcast %21 : vector<8x1xf32> to vector<8x16xf32>
    %23 = arith.subf %19, %22 : vector<8x16xf32>
    %24 = math.exp %23 : vector<8x16xf32>
    %cst_18 = arith.constant dense<0.000000e+00> : vector<8xf32>
    %25 = vector.multi_reduction <add>, %24, %cst_18 [1] : vector<8x16xf32> to vector<8xf32>
    %26 = vector.shape_cast %25 : vector<8xf32> to vector<8x1xf32>
    %27 = math.log %26 : vector<8x1xf32>
    %28 = vector.broadcast %27 : vector<8x1xf32> to vector<8x16xf32>
    %29 = arith.subf %23, %28 : vector<8x16xf32>
    %30 = math.exp %29 : vector<8x16xf32>
    %c0_19 = arith.constant 0 : index
    %c0_20 = arith.constant 0 : index
    %31 = vector.load %arg8[%c0_19, %c0_20] : memref<8x16xf32, #tpu.memory_space<vmem>>, vector<8x16xf32>
    tpu.vector_store %arg8[%c0_19, %c0_20], %30 {strides = array<i32>} : memref<8x16xf32, #tpu.memory_space<vmem>>, vector<8x16xf32>,
    %c0_21 = arith.constant 0 : index
    %c0_22 = arith.constant 0 : index
    %32 = vector.load %arg9[%c0_21, %c0_22] : memref<8x16xf32, #tpu.memory_space<vmem>>, vector<8x16xf32>
    tpu.vector_store %arg9[%c0_21, %c0_22], %29 {strides = array<i32>} : memref<8x16xf32, #tpu.memory_space<vmem>>, vector<8x16xf32>,
    return
  }
  func.func @transform_0(%arg0: i32) -> (i32, i32) {
    %c0_i32 = arith.constant 0 : i32
    %c0_i32_0 = arith.constant 0 : i32
    return %arg0, %c0_i32 : i32, i32
  }
  func.func @transform_1(%arg0: i32) -> (i32, i32) {
    %c0_i32 = arith.constant 0 : i32
    %c0_i32_0 = arith.constant 0 : i32
    %c0_i32_1 = arith.constant 0 : i32
    return %c0_i32, %c0_i32_0 : i32, i32
  }
  func.func @transform_2(%arg0: i32) -> (i32, i32) {
    %c0_i32 = arith.constant 0 : i32
    %c0_i32_0 = arith.constant 0 : i32
    %c0_i32_1 = arith.constant 0 : i32
    return %c0_i32, %c0_i32_0 : i32, i32
  }
  func.func @transform_3(%arg0: i32) -> (i32, i32) {
    %c0_i32 = arith.constant 0 : i32
    %c0_i32_0 = arith.constant 0 : i32
    %c0_i32_1 = arith.constant 0 : i32
    return %c0_i32, %c0_i32_0 : i32, i32
  }
  func.func @transform_4(%arg0: i32) -> (i32, i32) {
    %c0_i32 = arith.constant 0 : i32
    %c0_i32_0 = arith.constant 0 : i32
    %c0_i32_1 = arith.constant 0 : i32
    return %c0_i32, %c0_i32_0 : i32, i32
  }
  func.func @transform_5(%arg0: i32) -> (i32, i32) {
    %c0_i32 = arith.constant 0 : i32
    %c0_i32_0 = arith.constant 0 : i32
    %c0_i32_1 = arith.constant 0 : i32
    return %c0_i32, %c0_i32_0 : i32, i32
  }
  func.func @transform_6(%arg0: i32) -> (i32, i32) {
    %c0_i32 = arith.constant 0 : i32
    %c0_i32_0 = arith.constant 0 : i32
    %c0_i32_1 = arith.constant 0 : i32
    return %c0_i32, %c0_i32_0 : i32, i32
  }
  func.func @transform_7(%arg0: i32) -> (i32, i32) {
    %c0_i32 = arith.constant 0 : i32
    %c0_i32_0 = arith.constant 0 : i32
    return %arg0, %c0_i32 : i32, i32
  }
  func.func @transform_8(%arg0: i32) -> (i32, i32) {
    %c0_i32 = arith.constant 0 : i32
    %c0_i32_0 = arith.constant 0 : i32
    return %arg0, %c0_i32 : i32, i32
  }
}

module attributes {stable_mosaic.version = 11 : i64} {
  func.func @kernel(%arg0: i32, %arg1: memref<8x32xf32, #tpu.memory_space<vmem>>, %arg2: memref<32x32xf32, #tpu.memory_space<vmem>>, %arg3: memref<32x32xf32, #tpu.memory_space<vmem>>, %arg4: memref<32x16xf32, #tpu.memory_space<vmem>>, %arg5: memref<1x32xf32, #tpu.memory_space<vmem>>, %arg6: memref<1x32xf32, #tpu.memory_space<vmem>>, %arg7: memref<1x16xf32, #tpu.memory_space<vmem>>, %arg8: memref<8x16xf32, #tpu.memory_space<vmem>>, %arg9: memref<8x16xf32, #tpu.memory_space<vmem>>) attributes {dimension_semantics = [#tpu.dimension_semantics<parallel>], iteration_bounds = array<i64: 1>, scalar_prefetch = 0 : i64, scratch_operands = 0 : i64, tpu.core_type = #tpu.core_type<tc>, window_params = [{transform_indices = @transform_0, window_bounds = array<i64: 8, 32>}, {pipeline_mode = #tpu.pipeline_mode<synchronous>, transform_indices = @transform_1, window_bounds = array<i64: 32, 32>}, {pipeline_mode = #tpu.pipeline_mode<synchronous>, transform_indices = @transform_2, window_bounds = array<i64: 32, 32>}, {pipeline_mode = #tpu.pipeline_mode<synchronous>, transform_indices = @transform_3, window_bounds = array<i64: 32, 16>}, {pipeline_mode = #tpu.pipeline_mode<synchronous>, transform_indices = @transform_4, window_bounds = array<i64: 1, 32>}, {pipeline_mode = #tpu.pipeline_mode<synchronous>, transform_indices = @transform_5, window_bounds = array<i64: 1, 32>}, {pipeline_mode = #tpu.pipeline_mode<synchronous>, transform_indices = @transform_6, window_bounds = array<i64: 1, 16>}, {transform_indices = @transform_7, window_bounds = array<i64: 8, 16>}, {transform_indices = @transform_8, window_bounds = array<i64: 8, 16>}]} {
    %c0 = arith.constant 0 : index
    %c0_0 = arith.constant 0 : index
    %0 = vector.load %arg1[%c0, %c0_0] : memref<8x32xf32, #tpu.memory_space<vmem>>, vector<8x32xf32>
    %c0_1 = arith.constant 0 : index
    %c0_2 = arith.constant 0 : index
    %1 = vector.load %arg2[%c0_1, %c0_2] : memref<32x32xf32, #tpu.memory_space<vmem>>, vector<32x32xf32>
    %cst = arith.constant dense<0.000000e+00> : vector<8x32xf32>
    %2 = tpu.matmul %0, %1, %cst {dimension_numbers = #tpu.dot_dimension_numbers<[1], [0], [0], [1], [0, 0, 1, 1], [], []>} : vector<8x32xf32>, vector<32x32xf32>, vector<8x32xf32> -> vector<8x32xf32>
    %c0_3 = arith.constant 0 : index
    %c0_4 = arith.constant 0 : index
    %3 = vector.load %arg5[%c0_3, %c0_4] : memref<1x32xf32, #tpu.memory_space<vmem>>, vector<1x32xf32>
    %4 = vector.broadcast %3 : vector<1x32xf32> to vector<8x32xf32>
    %5 = arith.addf %2, %4 : vector<8x32xf32>
    %cst_5 = arith.constant 0.000000e+00 : f32
    %6 = vector.broadcast %cst_5 : f32 to vector<8x32xf32>
    %7 = arith.maximumf %5, %6 : vector<8x32xf32>
    %c0_6 = arith.constant 0 : index
    %c0_7 = arith.constant 0 : index
    %8 = vector.load %arg3[%c0_6, %c0_7] : memref<32x32xf32, #tpu.memory_space<vmem>>, vector<32x32xf32>
    %cst_8 = arith.constant dense<0.000000e+00> : vector<8x32xf32>
    %9 = tpu.matmul %7, %8, %cst_8 {dimension_numbers = #tpu.dot_dimension_numbers<[1], [0], [0], [1], [0, 0, 1, 1], [], []>} : vector<8x32xf32>, vector<32x32xf32>, vector<8x32xf32> -> vector<8x32xf32>
    %c0_9 = arith.constant 0 : index
    %c0_10 = arith.constant 0 : index
    %10 = vector.load %arg6[%c0_9, %c0_10] : memref<1x32xf32, #tpu.memory_space<vmem>>, vector<1x32xf32>
    %11 = vector.broadcast %10 : vector<1x32xf32> to vector<8x32xf32>
    %12 = arith.addf %9, %11 : vector<8x32xf32>
    %cst_11 = arith.constant 0.000000e+00 : f32
    %13 = vector.broadcast %cst_11 : f32 to vector<8x32xf32>
    %14 = arith.maximumf %12, %13 : vector<8x32xf32>
    %c0_12 = arith.constant 0 : index
    %c0_13 = arith.constant 0 : index
    %15 = vector.load %arg4[%c0_12, %c0_13] : memref<32x16xf32, #tpu.memory_space<vmem>>, vector<32x16xf32>
    %cst_14 = arith.constant dense<0.000000e+00> : vector<8x16xf32>
    %16 = tpu.matmul %14, %15, %cst_14 {dimension_numbers = #tpu.dot_dimension_numbers<[1], [0], [0], [1], [0, 0, 1, 1], [], []>} : vector<8x32xf32>, vector<32x16xf32>, vector<8x16xf32> -> vector<8x16xf32>
    %c0_15 = arith.constant 0 : index
    %c0_16 = arith.constant 0 : index
    %17 = vector.load %arg7[%c0_15, %c0_16] : memref<1x16xf32, #tpu.memory_space<vmem>>, vector<1x16xf32>
    %18 = vector.broadcast %17 : vector<1x16xf32> to vector<8x16xf32>
    %19 = arith.addf %16, %18 : vector<8x16xf32>
    %cst_17 = arith.constant dense<0xFF800000> : vector<8xf32>
    %20 = vector.multi_reduction <maximumf>, %19, %cst_17 [1] : vector<8x16xf32> to vector<8xf32>
    %21 = vector.shape_cast %20 : vector<8xf32> to vector<8x1xf32>
    %22 = vector.broadcast %21 : vector<8x1xf32> to vector<8x16xf32>
    %23 = arith.subf %19, %22 : vector<8x16xf32>
    %24 = math.exp %23 : vector<8x16xf32>
    %cst_18 = arith.constant dense<0.000000e+00> : vector<8xf32>
    %25 = vector.multi_reduction <add>, %24, %cst_18 [1] : vector<8x16xf32> to vector<8xf32>
    %26 = vector.shape_cast %25 : vector<8xf32> to vector<8x1xf32>
    %27 = math.log %26 : vector<8x1xf32>
    %28 = vector.broadcast %27 : vector<8x1xf32> to vector<8x16xf32>
    %29 = arith.subf %23, %28 : vector<8x16xf32>
    %30 = math.exp %29 : vector<8x16xf32>
    %c0_19 = arith.constant 0 : index
    %c0_20 = arith.constant 0 : index
    %31 = vector.load %arg8[%c0_19, %c0_20] : memref<8x16xf32, #tpu.memory_space<vmem>>, vector<8x16xf32>
    tpu.vector_store %arg8[%c0_19, %c0_20], %30 {strides = array<i32>} : memref<8x16xf32, #tpu.memory_space<vmem>>, vector<8x16xf32>,
    %c0_21 = arith.constant 0 : index
    %c0_22 = arith.constant 0 : index
    %32 = vector.load %arg9[%c0_21, %c0_22] : memref<8x16xf32, #tpu.memory_space<vmem>>, vector<8x16xf32>
    tpu.vector_store %arg9[%c0_21, %c0_22], %29 {strides = array<i32>} : memref<8x16xf32, #tpu.memory_space<vmem>>, vector<8x16xf32>,
    return
  }
  func.func @transform_0(%arg0: i32) -> (i32, i32) {
    %c0_i32 = arith.constant 0 : i32
    %c0_i32_0 = arith.constant 0 : i32
    return %arg0, %c0_i32 : i32, i32
  }
  func.func @transform_1(%arg0: i32) -> (i32, i32) {
    %c0_i32 = arith.constant 0 : i32
    %c0_i32_0 = arith.constant 0 : i32
    %c0_i32_1 = arith.constant 0 : i32
    return %c0_i32, %c0_i32_0 : i32, i32
  }
  func.func @transform_2(%arg0: i32) -> (i32, i32) {
    %c0_i32 = arith.constant 0 : i32
    %c0_i32_0 = arith.constant 0 : i32
    %c0_i32_1 = arith.constant 0 : i32
    return %c0_i32, %c0_i32_0 : i32, i32
  }
  func.func @transform_3(%arg0: i32) -> (i32, i32) {
    %c0_i32 = arith.constant 0 : i32
    %c0_i32_0 = arith.constant 0 : i32
    %c0_i32_1 = arith.constant 0 : i32
    return %c0_i32, %c0_i32_0 : i32, i32
  }
  func.func @transform_4(%arg0: i32) -> (i32, i32) {
    %c0_i32 = arith.constant 0 : i32
    %c0_i32_0 = arith.constant 0 : i32
    %c0_i32_1 = arith.constant 0 : i32
    return %c0_i32, %c0_i32_0 : i32, i32
  }
  func.func @transform_5(%arg0: i32) -> (i32, i32) {
    %c0_i32 = arith.constant 0 : i32
    %c0_i32_0 = arith.constant 0 : i32
    %c0_i32_1 = arith.constant 0 : i32
    return %c0_i32, %c0_i32_0 : i32, i32
  }
  func.func @transform_6(%arg0: i32) -> (i32, i32) {
    %c0_i32 = arith.constant 0 : i32
    %c0_i32_0 = arith.constant 0 : i32
    %c0_i32_1 = arith.constant 0 : i32
    return %c0_i32, %c0_i32_0 : i32, i32
  }
  func.func @transform_7(%arg0: i32) -> (i32, i32) {
    %c0_i32 = arith.constant 0 : i32
    %c0_i32_0 = arith.constant 0 : i32
    return %arg0, %c0_i32 : i32, i32
  }
  func.func @transform_8(%arg0: i32) -> (i32, i32) {
    %c0_i32 = arith.constant 0 : i32
    %c0_i32_0 = arith.constant 0 : i32
    return %arg0, %c0_i32 : i32, i32
  }
}

</mosaic_0001>

<llo_original>
// kernel: tpu_custom_call.1
$region0: #{tpu_custom_call.1}
  #allocation0 [shape = 'u32[]', space=smem, size = 0x4, offset = 0x4, fixed_abs, tag = 'smem constant byte address 0x4 - core index']
  #allocation1 [shape = 'u32[144,128]{1,0:T(1,128)}', space=vmem, size = 0x12000, scoped, tag = 'internal scratch']
  %s0 = inlined_call_operand.vmem [shape: f32[8,32], index: 0, kind: input, shape index: {}]
  %s1 = inlined_call_operand.vmem [shape: f32[32,32], index: 1, kind: input, shape index: {}]
  %s2 = inlined_call_operand.hbm [shape: f32[32,32], index: 2, kind: input, shape index: {}]
  %s3 = inlined_call_operand.vmem [shape: f32[32,16], index: 3, kind: input, shape index: {}]
  %s4 = inlined_call_operand.vmem [shape: f32[1,32], index: 4, kind: input, shape index: {}]
  %s5 = inlined_call_operand.vmem [shape: f32[1,32], index: 5, kind: input, shape index: {}]
  %s6 = inlined_call_operand.vmem [shape: f32[1,16], index: 6, kind: input, shape index: {}]
  %s7 = inlined_call_operand.hbm [shape: f32[8,16], index: 7, kind: output, shape index: {0}]
  %s8 = inlined_call_operand.hbm [shape: f32[8,16], index: 8, kind: output, shape index: {1}]
  %9 = xla_tuple %s7, %s8
  %s10 = sld [smem:[#allocation0]]
  $region50: #{tpu_custom_call.1} parent=0
    _
  %s12 = ssub.s32 1, %s10
  %s13 = scalar_select 0, %s12, %s10
  $region1: #{tpu_custom_call.1} parent=0
    #allocation2 [shape = 'u8[16384]{0}', space=vmem, size = 0x4000, scoped, tag = 'input window, operand 2, single buffered']
    #allocation3 [shape = 's32[1]{0}', space=sflag, size = 0x4, scoped, tag = 'scoped memory for tpu_custom_call.1']
    #allocation4 [shape = 's32[1]{0}', space=sflag, size = 0x4, scoped, tag = 'scoped memory for tpu_custom_call.1']
    #allocation5 [shape = 'u8[4096]{0}', space=vmem, size = 0x1000, scoped, tag = 'output window, operand 0, single buffered']
    #allocation6 [shape = 'u8[4096]{0}', space=vmem, size = 0x1000, scoped, tag = 'output window, operand 1, single buffered']
    #allocation7 [shape = 's32[1]{0}', space=sflag, size = 0x4, scoped, tag = 'scoped memory for tpu_custom_call.1']
    %14 = vsyncpa [#allocation3], 0
    %15 = vsyncpa [#allocation4], 0
    %16 = vsyncpa [#allocation7], 0
    // Predicated region
    $region2: #{tpu_custom_call.1} parent=1 // pred_check
      _
    $region3: #{tpu_custom_call.1} parent=1 // pred_check_branch
      %18 = sbr.rel (0) target = $region5
    $region4: #{tpu_custom_call.1} parent=1 // pred_region
      _
    $region5: #{tpu_custom_call.1} parent=1 // pred_fallthru
      _
    // Predicated region
    $region6: #{tpu_custom_call.1} parent=1 // pred_check
      _
    $region7: #{tpu_custom_call.1} parent=1 // pred_check_branch
      %20 = sbr.rel (0) target = $region9
    $region8: #{tpu_custom_call.1} parent=1 // pred_region
      _
    $region9: #{tpu_custom_call.1} parent=1 // pred_fallthru
      _
    // Predicated region
    $region10: #{tpu_custom_call.1} parent=1 // pred_check
      _
    $region11: #{tpu_custom_call.1} parent=1 // pred_check_branch
      %22 = sbr.rel (0) target = $region13
    $region12: #{tpu_custom_call.1} parent=1 // pred_region
      %s24 = ssub.s32 512, 512
      %25 = vsyncadd [#allocation3], %s24
      %s26 = sshll.u32 [#allocation2], 4
      %s27 = int_to_ptr.vmem [resolvable:$true] %s26
      %32 = dma.hbm_to_vmem [thread:$0]  %s2, 512, %s27, [#allocation3], 128, 128, 8
    $region13: #{tpu_custom_call.1} parent=1 // pred_fallthru
      _
    // Predicated region
    $region14: #{tpu_custom_call.1} parent=1 // pred_check
      _
    $region15: #{tpu_custom_call.1} parent=1 // pred_check_branch
      %34 = sbr.rel (0) target = $region17
    $region16: #{tpu_custom_call.1} parent=1 // pred_region
      _
    $region17: #{tpu_custom_call.1} parent=1 // pred_fallthru
      _
    // Predicated region
    $region18: #{tpu_custom_call.1} parent=1 // pred_check
      _
    $region19: #{tpu_custom_call.1} parent=1 // pred_check_branch
      %36 = sbr.rel (0) target = $region21
    $region20: #{tpu_custom_call.1} parent=1 // pred_region
      _
    $region21: #{tpu_custom_call.1} parent=1 // pred_fallthru
      _
    // Predicated region
    $region22: #{tpu_custom_call.1} parent=1 // pred_check
      _
    $region23: #{tpu_custom_call.1} parent=1 // pred_check_branch
      %38 = sbr.rel (0) target = $region25
    $region24: #{tpu_custom_call.1} parent=1 // pred_region
      _
    $region25: #{tpu_custom_call.1} parent=1 // pred_fallthru
      _
    // Predicated region
    $region26: #{tpu_custom_call.1} parent=1 // pred_check
      _
    $region27: #{tpu_custom_call.1} parent=1 // pred_check_branch
      %40 = sbr.rel (0) target = $region29
    $region28: #{tpu_custom_call.1} parent=1 // pred_region
      _
    $region29: #{tpu_custom_call.1} parent=1 // pred_fallthru
      _
    // Predicated region
    $region30: #{tpu_custom_call.1} parent=1 // pred_check
      _
    $region31: #{tpu_custom_call.1} parent=1 // pred_check_branch
      %42 = sbr.rel (0) target = $region33
    $region32: #{tpu_custom_call.1} parent=1 // pred_region
      %43 = dma.done [#allocation3], 512
    $region33: #{tpu_custom_call.1} parent=1 // pred_fallthru
      _
    %v44 = vld [vmem:[%s0] sm:$0xff]
    %v45 = vld [vmem:[%s1] sm:$0xff]
    %v46 = vld [vmem:[%s1 + $0x8] sm:$0xff]
    %v47 = vld [vmem:[%s1 + $0x10] sm:$0xff]
    %v48 = vld [vmem:[%s1 + $0x18] sm:$0xff]
    %v49 = vld [vmem:[%s4] sm:$0x1]
    %v51 = vlaneseq
    %v52 = vshrl.u32 %v51, 7
    %v53 = vsub.s32 0, %v52
    %v54 = vrot.slane %v49, %v53
    %vm56 = vcmask 261120
    %v58 = vsel %vm56, %v44, 0
    %60 = vmatprep.subr.mxu0 0.0
    %61 = vmatpush1.msra.mxu0 0.0
    %62 = vmatprep.subr.mxu0 0.0
    %63 = vmatpush1.msra.mxu0 0.0
    %64 = vmatprep.subr.mxu0 0.0
    %65 = vmatpush1.msra.mxu0 0.0
    %66 = vmatprep.subr.mxu0 0.0
    %67 = vmatpush1.msra.mxu0 0.0
    %68 = vmatprep.subr.mxu0 0.0
    %69 = vmatpush1.msra.mxu0 0.0
    %70 = vmatprep.subr.mxu0 0.0
    %71 = vmatpush1.msra.mxu0 0.0
    %72 = vmatprep.subr.mxu0 0.0
    %73 = vmatpush1.msra.mxu0 0.0
    %74 = vmatprep.subr.mxu0 0.0
    %75 = vmatpush1.msra.mxu0 0.0
    %76 = vmatprep.subr.mxu0 0.0
    %77 = vmatpush1.msra.mxu0 0.0
    %78 = vmatprep.subr.mxu0 0.0
    %79 = vmatpush1.msra.mxu0 0.0
    %80 = vmatprep.subr.mxu0 0.0
    %81 = vmatpush1.msra.mxu0 0.0
    %82 = vmatprep.subr.mxu0 0.0
    %83 = vmatpush1.msra.mxu0 0.0
    %84 = vmatprep.subr.mxu0 0.0
    %85 = vmatpush1.msra.mxu0 %v48
    %86 = vmatprep.subr.mxu0 0.0
    %87 = vmatpush1.msra.mxu0 %v47
    %88 = vmatprep.subr.mxu0 0.0
    %89 = vmatpush1.msra.mxu0 %v46
    %90 = vmatprep.subr.mxu0 0.0
    %91 = vmatpush1.msra.mxu0 %v45
    %92 = vmatprep.subr.mxu0 0.0
    %93 = vmatpush2.msra.mxu0 0.0
    %94 = vmatprep.subr.mxu0 0.0
    %95 = vmatpush2.msra.mxu0 0.0
    %96 = vmatprep.subr.mxu0 0.0
    %97 = vmatpush2.msra.mxu0 0.0
    %98 = vmatprep.subr.mxu0 0.0
    %99 = vmatpush2.msra.mxu0 0.0
    %100 = vmatprep.subr.mxu0 0.0
    %101 = vmatpush2.msra.mxu0 0.0
    %102 = vmatprep.subr.mxu0 0.0
    %103 = vmatpush2.msra.mxu0 0.0
    %104 = vmatprep.subr.mxu0 0.0
    %105 = vmatpush2.msra.mxu0 0.0
    %106 = vmatprep.subr.mxu0 0.0
    %107 = vmatpush2.msra.mxu0 0.0
    %108 = vmatprep.subr.mxu0 0.0
    %109 = vmatpush2.msra.mxu0 0.0
    %110 = vmatprep.subr.mxu0 0.0
    %111 = vmatpush2.msra.mxu0 0.0
    %112 = vmatprep.subr.mxu0 0.0
    %113 = vmatpush2.msra.mxu0 0.0
    %114 = vmatprep.subr.mxu0 0.0
    %115 = vmatpush2.msra.mxu0 0.0
    %116 = vmatprep.subr.mxu0 0.0
    %117 = vmatpush2.msra.mxu0 0.0
    %118 = vmatprep.subr.mxu0 0.0
    %119 = vmatpush2.msra.mxu0 0.0
    %120 = vmatprep.subr.mxu0 0.0
    %121 = vmatpush2.msra.mxu0 0.0
    %122 = vmatprep.subr.mxu0 0.0
    %123 = vmatpush2.msra.mxu0 0.0
    %124 = vmatprep.mubr.f32.mxu0 0.0
    %125 = vmatmul.mubr.f32.gmra.mxu0 %v58
    %v126 = vpop.f32.mrf.mxu0
    %v127 = vadd.f32 %v54, %v126
    %v128 = vpop.f32.mrf.mxu0
    %129 = vdwg.mxu0
    %v130 = vmax.f32 %v127, 0.0
    %v131 = vld [vmem:[#allocation2] sm:$0xff]
    %v132 = vld [vmem:[#allocation2 + $0x8] sm:$0xff]
    %v133 = vld [vmem:[#allocation2 + $0x10] sm:$0xff]
    %v134 = vld [vmem:[#allocation2 + $0x18] sm:$0xff]
    %v135 = vld [vmem:[%s5] sm:$0x1]
    %v137 = vlaneseq
    %v138 = vshrl.u32 %v137, 7
    %v139 = vsub.s32 0, %v138
    %v140 = vrot.slane %v135, %v139
    %v143 = vsel %vm56, %v130, 0
    %145 = vmatprep.subr.mxu0 0.0
    %146 = vmatpush1.msra.mxu0 0.0
    %147 = vmatprep.subr.mxu0 0.0
    %148 = vmatpush1.msra.mxu0 0.0
    %149 = vmatprep.subr.mxu0 0.0
    %150 = vmatpush1.msra.mxu0 0.0
    %151 = vmatprep.subr.mxu0 0.0
    %152 = vmatpush1.msra.mxu0 0.0
    %153 = vmatprep.subr.mxu0 0.0
    %154 = vmatpush1.msra.mxu0 0.0
    %155 = vmatprep.subr.mxu0 0.0
    %156 = vmatpush1.msra.mxu0 0.0
    %157 = vmatprep.subr.mxu0 0.0
    %158 = vmatpush1.msra.mxu0 0.0
    %159 = vmatprep.subr.mxu0 0.0
    %160 = vmatpush1.msra.mxu0 0.0
    %161 = vmatprep.subr.mxu0 0.0
    %162 = vmatpush1.msra.mxu0 0.0
    %163 = vmatprep.subr.mxu0 0.0
    %164 = vmatpush1.msra.mxu0 0.0
    %165 = vmatprep.subr.mxu0 0.0
    %166 = vmatpush1.msra.mxu0 0.0
    %167 = vmatprep.subr.mxu0 0.0
    %168 = vmatpush1.msra.mxu0 0.0
    %169 = vmatprep.subr.mxu0 0.0
    %170 = vmatpush1.msra.mxu0 %v134
    %171 = vmatprep.subr.mxu0 0.0
    %172 = vmatpush1.msra.mxu0 %v133
    %173 = vmatprep.subr.mxu0 0.0
    %174 = vmatpush1.msra.mxu0 %v132
    %175 = vmatprep.subr.mxu0 0.0
    %176 = vmatpush1.msra.mxu0 %v131
    %177 = vmatprep.subr.mxu0 0.0
    %178 = vmatpush2.msra.mxu0 0.0
    %179 = vmatprep.subr.mxu0 0.0
    %180 = vmatpush2.msra.mxu0 0.0
    %181 = vmatprep.subr.mxu0 0.0
    %182 = vmatpush2.msra.mxu0 0.0
    %183 = vmatprep.subr.mxu0 0.0
    %184 = vmatpush2.msra.mxu0 0.0
    %185 = vmatprep.subr.mxu0 0.0
    %186 = vmatpush2.msra.mxu0 0.0
    %187 = vmatprep.subr.mxu0 0.0
    %188 = vmatpush2.msra.mxu0 0.0
    %189 = vmatprep.subr.mxu0 0.0
    %190 = vmatpush2.msra.mxu0 0.0
    %191 = vmatprep.subr.mxu0 0.0
    %192 = vmatpush2.msra.mxu0 0.0
    %193 = vmatprep.subr.mxu0 0.0
    %194 = vmatpush2.msra.mxu0 0.0
    %195 = vmatprep.subr.mxu0 0.0
    %196 = vmatpush2.msra.mxu0 0.0
    %197 = vmatprep.subr.mxu0 0.0
    %198 = vmatpush2.msra.mxu0 0.0
    %199 = vmatprep.subr.mxu0 0.0
    %200 = vmatpush2.msra.mxu0 0.0
    %201 = vmatprep.subr.mxu0 0.0
    %202 = vmatpush2.msra.mxu0 0.0
    %203 = vmatprep.subr.mxu0 0.0
    %204 = vmatpush2.msra.mxu0 0.0
    %205 = vmatprep.subr.mxu0 0.0
    %206 = vmatpush2.msra.mxu0 0.0
    %207 = vmatprep.subr.mxu0 0.0
    %208 = vmatpush2.msra.mxu0 0.0
    %209 = vmatprep.mubr.f32.mxu0 0.0
    %210 = vmatmul.mubr.f32.gmra.mxu0 %v143
    %v211 = vpop.f32.mrf.mxu0
    %v212 = vadd.f32 %v140, %v211
    %v213 = vpop.f32.mrf.mxu0
    %214 = vdwg.mxu0
    %v215 = vmax.f32 %v212, 0.0
    %v216 = vld [vmem:[%s3] sm:$0xff]
    %v217 = vld [vmem:[%s3 + $0x8] sm:$0xff]
    %v218 = vld [vmem:[%s3 + $0x10] sm:$0xff]
    %v219 = vld [vmem:[%s3 + $0x18] sm:$0xff]
    %v220 = vld [vmem:[%s6] sm:$0x1]
    %v222 = vlaneseq
    %v223 = vshrl.u32 %v222, 7
    %v224 = vsub.s32 0, %v223
    %v225 = vrot.slane %v220, %v224
    %v228 = vsel %vm56, %v215, 0
    %230 = vmatprep.subr.mxu0 0.0
    %231 = vmatpush1.msra.mxu0 0.0
    %232 = vmatprep.subr.mxu0 0.0
    %233 = vmatpush1.msra.mxu0 0.0
    %234 = vmatprep.subr.mxu0 0.0
    %235 = vmatpush1.msra.mxu0 0.0
    %236 = vmatprep.subr.mxu0 0.0
    %237 = vmatpush1.msra.mxu0 0.0
    %238 = vmatprep.subr.mxu0 0.0
    %239 = vmatpush1.msra.mxu0 0.0
    %240 = vmatprep.subr.mxu0 0.0
    %241 = vmatpush1.msra.mxu0 0.0
    %242 = vmatprep.subr.mxu0 0.0
    %243 = vmatpush1.msra.mxu0 0.0
    %244 = vmatprep.subr.mxu0 0.0
    %245 = vmatpush1.msra.mxu0 0.0
    %246 = vmatprep.subr.mxu0 0.0
    %247 = vmatpush1.msra.mxu0 0.0
    %248 = vmatprep.subr.mxu0 0.0
    %249 = vmatpush1.msra.mxu0 0.0
    %250 = vmatprep.subr.mxu0 0.0
    %251 = vmatpush1.msra.mxu0 0.0
    %252 = vmatprep.subr.mxu0 0.0
    %253 = vmatpush1.msra.mxu0 0.0
    %254 = vmatprep.subr.mxu0 0.0
    %255 = vmatpush1.msra.mxu0 %v219
    %256 = vmatprep.subr.mxu0 0.0
    %257 = vmatpush1.msra.mxu0 %v218
    %258 = vmatprep.subr.mxu0 0.0
    %259 = vmatpush1.msra.mxu0 %v217
    %260 = vmatprep.subr.mxu0 0.0
    %261 = vmatpush1.msra.mxu0 %v216
    %262 = vmatprep.subr.mxu0 0.0
    %263 = vmatpush2.msra.mxu0 0.0
    %264 = vmatprep.subr.mxu0 0.0
    %265 = vmatpush2.msra.mxu0 0.0
    %266 = vmatprep.subr.mxu0 0.0
    %267 = vmatpush2.msra.mxu0 0.0
    %268 = vmatprep.subr.mxu0 0.0
    %269 = vmatpush2.msra.mxu0 0.0
    %270 = vmatprep.subr.mxu0 0.0
    %271 = vmatpush2.msra.mxu0 0.0
    %272 = vmatprep.subr.mxu0 0.0
    %273 = vmatpush2.msra.mxu0 0.0
    %274 = vmatprep.subr.mxu0 0.0
    %275 = vmatpush2.msra.mxu0 0.0
    %276 = vmatprep.subr.mxu0 0.0
    %277 = vmatpush2.msra.mxu0 0.0
    %278 = vmatprep.subr.mxu0 0.0
    %279 = vmatpush2.msra.mxu0 0.0
    %280 = vmatprep.subr.mxu0 0.0
    %281 = vmatpush2.msra.mxu0 0.0
    %282 = vmatprep.subr.mxu0 0.0
    %283 = vmatpush2.msra.mxu0 0.0
    %284 = vmatprep.subr.mxu0 0.0
    %285 = vmatpush2.msra.mxu0 0.0
    %286 = vmatprep.subr.mxu0 0.0
    %287 = vmatpush2.msra.mxu0 0.0
    %288 = vmatprep.subr.mxu0 0.0
    %289 = vmatpush2.msra.mxu0 0.0
    %290 = vmatprep.subr.mxu0 0.0
    %291 = vmatpush2.msra.mxu0 0.0
    %292 = vmatprep.subr.mxu0 0.0
    %293 = vmatpush2.msra.mxu0 0.0
    %294 = vmatprep.mubr.f32.mxu0 0.0
    %295 = vmatmul.mubr.f32.gmra.mxu0 %v228
    %v296 = vpop.f32.mrf.mxu0
    %v297 = vadd.f32 %v225, %v296
    %v298 = vpop.f32.mrf.mxu0
    %299 = vdwg.mxu0
    %vm300 = vcmask 130048
    %v301 = vsel %vm300, %v297, -inf
    %302 = vmax.xlane.f32.xlu0 %v301
    %v303 = vpop.xlane.xlu0 %302
    %v304 = vsub.f32 %v297, %v303
    %v305 = vmul.f32 %v304, 1.442695
    %v306 = vpow.pop %v305
    %v307 = vsel %vm300, %v306, 0.0
    %308 = vadd.xlane.f32.xlu0 %v307
    %v309 = vpop.xlane.xlu0 %308
    %v310 = vlog2.pop %v309
    %v311 = vmul.f32 %v310, 0.6931472
    %v312 = vsub.f32 %v304, %v311
    %v313 = vmul.f32 %v312, 1.442695
    %v314 = vpow.pop %v313
    %315 = vst.msk [vmem:[#allocation5] sm:$0xff] %vm300, %v314
    %316 = vst.msk [vmem:[#allocation6] sm:$0xff] %vm300, %v312
    // Predicated region
    $region34: #{tpu_custom_call.1} parent=1 // pred_check
      _
    $region35: #{tpu_custom_call.1} parent=1 // pred_check_branch
      %318 = sbr.rel (0) target = $region37
    $region36: #{tpu_custom_call.1} parent=1 // pred_region
      %s320 = ssub.s32 128, 128
      %321 = vsyncadd [#allocation4], %s320
      %s323 = sshll.u32 [#allocation5], 4
      %s324 = int_to_ptr.vmem [resolvable:$true] %s323
      %326 = dma.vmem_to_hbm [thread:$0]  %s324, 128, %s7, [#allocation4]
    $region37: #{tpu_custom_call.1} parent=1 // pred_fallthru
      _
    // Predicated region
    $region38: #{tpu_custom_call.1} parent=1 // pred_check
      _
    $region39: #{tpu_custom_call.1} parent=1 // pred_check_branch
      %328 = sbr.rel (0) target = $region41
    $region40: #{tpu_custom_call.1} parent=1 // pred_region
      %s330 = ssub.s32 128, 128
      %331 = vsyncadd [#allocation7], %s330
      %s333 = sshll.u32 [#allocation6], 4
      %s334 = int_to_ptr.vmem [resolvable:$true] %s333
      %336 = dma.vmem_to_hbm [thread:$0]  %s334, 128, %s8, [#allocation7]
    $region41: #{tpu_custom_call.1} parent=1 // pred_fallthru
      _
    // Predicated region
    $region42: #{tpu_custom_call.1} parent=1 // pred_check
      _
    $region43: #{tpu_custom_call.1} parent=1 // pred_check_branch
      %338 = sbr.rel (0) target = $region45
    $region44: #{tpu_custom_call.1} parent=1 // pred_region
      %339 = dma.done [#allocation4], 128
    $region45: #{tpu_custom_call.1} parent=1 // pred_fallthru
      _
    // Predicated region
    $region46: #{tpu_custom_call.1} parent=1 // pred_check
      _
    $region47: #{tpu_custom_call.1} parent=1 // pred_check_branch
      %341 = sbr.rel (0) target = $region49
    $region48: #{tpu_custom_call.1} parent=1 // pred_region
      %342 = dma.done [#allocation7], 128
    $region49: #{tpu_custom_call.1} parent=1 // pred_fallthru
      _
    %343 = vsyncpa [#allocation3], 1
    %344 = vsyncpa [#allocation4], 1
    %345 = vsyncpa [#allocation7], 1

// kernel: tpu_custom_call.1
$region0: #{tpu_custom_call.1}
  #allocation0 [shape = 'u32[]', space=smem, size = 0x4, offset = 0x4, fixed_abs, tag = 'smem constant byte address 0x4 - core index']
  #allocation1 [shape = 'u32[144,128]{1,0:T(1,128)}', space=vmem, size = 0x12000, scoped, tag = 'internal scratch']
  %s0 = inlined_call_operand.vmem [shape: f32[8,32], index: 0, kind: input, shape index: {}]
  %s1 = inlined_call_operand.vmem [shape: f32[32,32], index: 1, kind: input, shape index: {}]
  %s2 = inlined_call_operand.hbm [shape: f32[32,32], index: 2, kind: input, shape index: {}]
  %s3 = inlined_call_operand.vmem [shape: f32[32,16], index: 3, kind: input, shape index: {}]
  %s4 = inlined_call_operand.vmem [shape: f32[1,32], index: 4, kind: input, shape index: {}]
  %s5 = inlined_call_operand.vmem [shape: f32[1,32], index: 5, kind: input, shape index: {}]
  %s6 = inlined_call_operand.vmem [shape: f32[1,16], index: 6, kind: input, shape index: {}]
  %s7 = inlined_call_operand.hbm [shape: f32[8,16], index: 7, kind: output, shape index: {0}]
  %s8 = inlined_call_operand.hbm [shape: f32[8,16], index: 8, kind: output, shape index: {1}]
  %9 = xla_tuple %s7, %s8
  %s10 = sld [smem:[#allocation0]]
  $region50: #{tpu_custom_call.1} parent=0
    _
  %s12 = ssub.s32 1, %s10
  %s13 = scalar_select 0, %s12, %s10
  $region1: #{tpu_custom_call.1} parent=0
    #allocation2 [shape = 'u8[16384]{0}', space=vmem, size = 0x4000, scoped, tag = 'input window, operand 2, single buffered']
    #allocation3 [shape = 's32[1]{0}', space=sflag, size = 0x4, scoped, tag = 'scoped memory for tpu_custom_call.1']
    #allocation4 [shape = 's32[1]{0}', space=sflag, size = 0x4, scoped, tag = 'scoped memory for tpu_custom_call.1']
    #allocation5 [shape = 'u8[4096]{0}', space=vmem, size = 0x1000, scoped, tag = 'output window, operand 0, single buffered']
    #allocation6 [shape = 'u8[4096]{0}', space=vmem, size = 0x1000, scoped, tag = 'output window, operand 1, single buffered']
    #allocation7 [shape = 's32[1]{0}', space=sflag, size = 0x4, scoped, tag = 'scoped memory for tpu_custom_call.1']
    %14 = vsyncpa [#allocation3], 0
    %15 = vsyncpa [#allocation4], 0
    %16 = vsyncpa [#allocation7], 0
    // Predicated region
    $region2: #{tpu_custom_call.1} parent=1 // pred_check
      _
    $region3: #{tpu_custom_call.1} parent=1 // pred_check_branch
      %18 = sbr.rel (0) target = $region5
    $region4: #{tpu_custom_call.1} parent=1 // pred_region
      _
    $region5: #{tpu_custom_call.1} parent=1 // pred_fallthru
      _
    // Predicated region
    $region6: #{tpu_custom_call.1} parent=1 // pred_check
      _
    $region7: #{tpu_custom_call.1} parent=1 // pred_check_branch
      %20 = sbr.rel (0) target = $region9
    $region8: #{tpu_custom_call.1} parent=1 // pred_region
      _
    $region9: #{tpu_custom_call.1} parent=1 // pred_fallthru
      _
    // Predicated region
    $region10: #{tpu_custom_call.1} parent=1 // pred_check
      _
    $region11: #{tpu_custom_call.1} parent=1 // pred_check_branch
      %22 = sbr.rel (0) target = $region13
    $region12: #{tpu_custom_call.1} parent=1 // pred_region
      %s24 = ssub.s32 512, 512
      %25 = vsyncadd [#allocation3], %s24
      %s26 = sshll.u32 [#allocation2], 4
      %s27 = int_to_ptr.vmem [resolvable:$true] %s26
      %32 = dma.hbm_to_vmem [thread:$0]  %s2, 512, %s27, [#allocation3], 128, 128, 8
    $region13: #{tpu_custom_call.1} parent=1 // pred_fallthru
      _
    // Predicated region
    $region14: #{tpu_custom_call.1} parent=1 // pred_check
      _
    $region15: #{tpu_custom_call.1} parent=1 // pred_check_branch
      %34 = sbr.rel (0) target = $region17
    $region16: #{tpu_custom_call.1} parent=1 // pred_region
      _
    $region17: #{tpu_custom_call.1} parent=1 // pred_fallthru
      _
    // Predicated region
    $region18: #{tpu_custom_call.1} parent=1 // pred_check
      _
    $region19: #{tpu_custom_call.1} parent=1 // pred_check_branch
      %36 = sbr.rel (0) target = $region21
    $region20: #{tpu_custom_call.1} parent=1 // pred_region
      _
    $region21: #{tpu_custom_call.1} parent=1 // pred_fallthru
      _
    // Predicated region
    $region22: #{tpu_custom_call.1} parent=1 // pred_check
      _
    $region23: #{tpu_custom_call.1} parent=1 // pred_check_branch
      %38 = sbr.rel (0) target = $region25
    $region24: #{tpu_custom_call.1} parent=1 // pred_region
      _
    $region25: #{tpu_custom_call.1} parent=1 // pred_fallthru
      _
    // Predicated region
    $region26: #{tpu_custom_call.1} parent=1 // pred_check
      _
    $region27: #{tpu_custom_call.1} parent=1 // pred_check_branch
      %40 = sbr.rel (0) target = $region29
    $region28: #{tpu_custom_call.1} parent=1 // pred_region
      _
    $region29: #{tpu_custom_call.1} parent=1 // pred_fallthru
      _
    // Predicated region
    $region30: #{tpu_custom_call.1} parent=1 // pred_check
      _
    $region31: #{tpu_custom_call.1} parent=1 // pred_check_branch
      %42 = sbr.rel (0) target = $region33
    $region32: #{tpu_custom_call.1} parent=1 // pred_region
      %43 = dma.done [#allocation3], 512
    $region33: #{tpu_custom_call.1} parent=1 // pred_fallthru
      _
    %v44 = vld [vmem:[%s0] sm:$0xff]
    %v45 = vld [vmem:[%s1] sm:$0xff]
    %v46 = vld [vmem:[%s1 + $0x8] sm:$0xff]
    %v47 = vld [vmem:[%s1 + $0x10] sm:$0xff]
    %v48 = vld [vmem:[%s1 + $0x18] sm:$0xff]
    %v49 = vld [vmem:[%s4] sm:$0x1]
    %v51 = vlaneseq
    %v52 = vshrl.u32 %v51, 7
    %v53 = vsub.s32 0, %v52
    %v54 = vrot.slane %v49, %v53
    %vm56 = vcmask 261120
    %v58 = vsel %vm56, %v44, 0
    %60 = vmatprep.subr.mxu0 0.0
    %61 = vmatpush1.msra.mxu0 0.0
    %62 = vmatprep.subr.mxu0 0.0
    %63 = vmatpush1.msra.mxu0 0.0
    %64 = vmatprep.subr.mxu0 0.0
    %65 = vmatpush1.msra.mxu0 0.0
    %66 = vmatprep.subr.mxu0 0.0
    %67 = vmatpush1.msra.mxu0 0.0
    %68 = vmatprep.subr.mxu0 0.0
    %69 = vmatpush1.msra.mxu0 0.0
    %70 = vmatprep.subr.mxu0 0.0
    %71 = vmatpush1.msra.mxu0 0.0
    %72 = vmatprep.subr.mxu0 0.0
    %73 = vmatpush1.msra.mxu0 0.0
    %74 = vmatprep.subr.mxu0 0.0
    %75 = vmatpush1.msra.mxu0 0.0
    %76 = vmatprep.subr.mxu0 0.0
    %77 = vmatpush1.msra.mxu0 0.0
    %78 = vmatprep.subr.mxu0 0.0
    %79 = vmatpush1.msra.mxu0 0.0
    %80 = vmatprep.subr.mxu0 0.0
    %81 = vmatpush1.msra.mxu0 0.0
    %82 = vmatprep.subr.mxu0 0.0
    %83 = vmatpush1.msra.mxu0 0.0
    %84 = vmatprep.subr.mxu0 0.0
    %85 = vmatpush1.msra.mxu0 %v48
    %86 = vmatprep.subr.mxu0 0.0
    %87 = vmatpush1.msra.mxu0 %v47
    %88 = vmatprep.subr.mxu0 0.0
    %89 = vmatpush1.msra.mxu0 %v46
    %90 = vmatprep.subr.mxu0 0.0
    %91 = vmatpush1.msra.mxu0 %v45
    %92 = vmatprep.subr.mxu0 0.0
    %93 = vmatpush2.msra.mxu0 0.0
    %94 = vmatprep.subr.mxu0 0.0
    %95 = vmatpush2.msra.mxu0 0.0
    %96 = vmatprep.subr.mxu0 0.0
    %97 = vmatpush2.msra.mxu0 0.0
    %98 = vmatprep.subr.mxu0 0.0
    %99 = vmatpush2.msra.mxu0 0.0
    %100 = vmatprep.subr.mxu0 0.0
    %101 = vmatpush2.msra.mxu0 0.0
    %102 = vmatprep.subr.mxu0 0.0
    %103 = vmatpush2.msra.mxu0 0.0
    %104 = vmatprep.subr.mxu0 0.0
    %105 = vmatpush2.msra.mxu0 0.0
    %106 = vmatprep.subr.mxu0 0.0
    %107 = vmatpush2.msra.mxu0 0.0
    %108 = vmatprep.subr.mxu0 0.0
    %109 = vmatpush2.msra.mxu0 0.0
    %110 = vmatprep.subr.mxu0 0.0
    %111 = vmatpush2.msra.mxu0 0.0
    %112 = vmatprep.subr.mxu0 0.0
    %113 = vmatpush2.msra.mxu0 0.0
    %114 = vmatprep.subr.mxu0 0.0
    %115 = vmatpush2.msra.mxu0 0.0
    %116 = vmatprep.subr.mxu0 0.0
    %117 = vmatpush2.msra.mxu0 0.0
    %118 = vmatprep.subr.mxu0 0.0
    %119 = vmatpush2.msra.mxu0 0.0
    %120 = vmatprep.subr.mxu0 0.0
    %121 = vmatpush2.msra.mxu0 0.0
    %122 = vmatprep.subr.mxu0 0.0
    %123 = vmatpush2.msra.mxu0 0.0
    %124 = vmatprep.mubr.f32.mxu0 0.0
    %125 = vmatmul.mubr.f32.gmra.mxu0 %v58
    %v126 = vpop.f32.mrf.mxu0
    %v127 = vadd.f32 %v54, %v126
    %v128 = vpop.f32.mrf.mxu0
    %129 = vdwg.mxu0
    %v130 = vmax.f32 %v127, 0.0
    %v131 = vld [vmem:[#allocation2] sm:$0xff]
    %v132 = vld [vmem:[#allocation2 + $0x8] sm:$0xff]
    %v133 = vld [vmem:[#allocation2 + $0x10] sm:$0xff]
    %v134 = vld [vmem:[#allocation2 + $0x18] sm:$0xff]
    %v135 = vld [vmem:[%s5] sm:$0x1]
    %v137 = vlaneseq
    %v138 = vshrl.u32 %v137, 7
    %v139 = vsub.s32 0, %v138
    %v140 = vrot.slane %v135, %v139
    %v143 = vsel %vm56, %v130, 0
    %145 = vmatprep.subr.mxu0 0.0
    %146 = vmatpush1.msra.mxu0 0.0
    %147 = vmatprep.subr.mxu0 0.0
    %148 = vmatpush1.msra.mxu0 0.0
    %149 = vmatprep.subr.mxu0 0.0
    %150 = vmatpush1.msra.mxu0 0.0
    %151 = vmatprep.subr.mxu0 0.0
    %152 = vmatpush1.msra.mxu0 0.0
    %153 = vmatprep.subr.mxu0 0.0
    %154 = vmatpush1.msra.mxu0 0.0
    %155 = vmatprep.subr.mxu0 0.0
    %156 = vmatpush1.msra.mxu0 0.0
    %157 = vmatprep.subr.mxu0 0.0
    %158 = vmatpush1.msra.mxu0 0.0
    %159 = vmatprep.subr.mxu0 0.0
    %160 = vmatpush1.msra.mxu0 0.0
    %161 = vmatprep.subr.mxu0 0.0
    %162 = vmatpush1.msra.mxu0 0.0
    %163 = vmatprep.subr.mxu0 0.0
    %164 = vmatpush1.msra.mxu0 0.0
    %165 = vmatprep.subr.mxu0 0.0
    %166 = vmatpush1.msra.mxu0 0.0
    %167 = vmatprep.subr.mxu0 0.0
    %168 = vmatpush1.msra.mxu0 0.0
    %169 = vmatprep.subr.mxu0 0.0
    %170 = vmatpush1.msra.mxu0 %v134
    %171 = vmatprep.subr.mxu0 0.0
    %172 = vmatpush1.msra.mxu0 %v133
    %173 = vmatprep.subr.mxu0 0.0
    %174 = vmatpush1.msra.mxu0 %v132
    %175 = vmatprep.subr.mxu0 0.0
    %176 = vmatpush1.msra.mxu0 %v131
    %177 = vmatprep.subr.mxu0 0.0
    %178 = vmatpush2.msra.mxu0 0.0
    %179 = vmatprep.subr.mxu0 0.0
    %180 = vmatpush2.msra.mxu0 0.0
    %181 = vmatprep.subr.mxu0 0.0
    %182 = vmatpush2.msra.mxu0 0.0
    %183 = vmatprep.subr.mxu0 0.0
    %184 = vmatpush2.msra.mxu0 0.0
    %185 = vmatprep.subr.mxu0 0.0
    %186 = vmatpush2.msra.mxu0 0.0
    %187 = vmatprep.subr.mxu0 0.0
    %188 = vmatpush2.msra.mxu0 0.0
    %189 = vmatprep.subr.mxu0 0.0
    %190 = vmatpush2.msra.mxu0 0.0
    %191 = vmatprep.subr.mxu0 0.0
    %192 = vmatpush2.msra.mxu0 0.0
    %193 = vmatprep.subr.mxu0 0.0
    %194 = vmatpush2.msra.mxu0 0.0
    %195 = vmatprep.subr.mxu0 0.0
    %196 = vmatpush2.msra.mxu0 0.0
    %197 = vmatprep.subr.mxu0 0.0
    %198 = vmatpush2.msra.mxu0 0.0
    %199 = vmatprep.subr.mxu0 0.0
    %200 = vmatpush2.msra.mxu0 0.0
    %201 = vmatprep.subr.mxu0 0.0
    %202 = vmatpush2.msra.mxu0 0.0
    %203 = vmatprep.subr.mxu0 0.0
    %204 = vmatpush2.msra.mxu0 0.0
    %205 = vmatprep.subr.mxu0 0.0
    %206 = vmatpush2.msra.mxu0 0.0
    %207 = vmatprep.subr.mxu0 0.0
    %208 = vmatpush2.msra.mxu0 0.0
    %209 = vmatprep.mubr.f32.mxu0 0.0
    %210 = vmatmul.mubr.f32.gmra.mxu0 %v143
    %v211 = vpop.f32.mrf.mxu0
    %v212 = vadd.f32 %v140, %v211
    %v213 = vpop.f32.mrf.mxu0
    %214 = vdwg.mxu0
    %v215 = vmax.f32 %v212, 0.0
    %v216 = vld [vmem:[%s3] sm:$0xff]
    %v217 = vld [vmem:[%s3 + $0x8] sm:$0xff]
    %v218 = vld [vmem:[%s3 + $0x10] sm:$0xff]
    %v219 = vld [vmem:[%s3 + $0x18] sm:$0xff]
    %v220 = vld [vmem:[%s6] sm:$0x1]
    %v222 = vlaneseq
    %v223 = vshrl.u32 %v222, 7
    %v224 = vsub.s32 0, %v223
    %v225 = vrot.slane %v220, %v224
    %v228 = vsel %vm56, %v215, 0
    %230 = vmatprep.subr.mxu0 0.0
    %231 = vmatpush1.msra.mxu0 0.0
    %232 = vmatprep.subr.mxu0 0.0
    %233 = vmatpush1.msra.mxu0 0.0
    %234 = vmatprep.subr.mxu0 0.0
    %235 = vmatpush1.msra.mxu0 0.0
    %236 = vmatprep.subr.mxu0 0.0
    %237 = vmatpush1.msra.mxu0 0.0
    %238 = vmatprep.subr.mxu0 0.0
    %239 = vmatpush1.msra.mxu0 0.0
    %240 = vmatprep.subr.mxu0 0.0
    %241 = vmatpush1.msra.mxu0 0.0
    %242 = vmatprep.subr.mxu0 0.0
    %243 = vmatpush1.msra.mxu0 0.0
    %244 = vmatprep.subr.mxu0 0.0
    %245 = vmatpush1.msra.mxu0 0.0
    %246 = vmatprep.subr.mxu0 0.0
    %247 = vmatpush1.msra.mxu0 0.0
    %248 = vmatprep.subr.mxu0 0.0
    %249 = vmatpush1.msra.mxu0 0.0
    %250 = vmatprep.subr.mxu0 0.0
    %251 = vmatpush1.msra.mxu0 0.0
    %252 = vmatprep.subr.mxu0 0.0
    %253 = vmatpush1.msra.mxu0 0.0
    %254 = vmatprep.subr.mxu0 0.0
    %255 = vmatpush1.msra.mxu0 %v219
    %256 = vmatprep.subr.mxu0 0.0
    %257 = vmatpush1.msra.mxu0 %v218
    %258 = vmatprep.subr.mxu0 0.0
    %259 = vmatpush1.msra.mxu0 %v217
    %260 = vmatprep.subr.mxu0 0.0
    %261 = vmatpush1.msra.mxu0 %v216
    %262 = vmatprep.subr.mxu0 0.0
    %263 = vmatpush2.msra.mxu0 0.0
    %264 = vmatprep.subr.mxu0 0.0
    %265 = vmatpush2.msra.mxu0 0.0
    %266 = vmatprep.subr.mxu0 0.0
    %267 = vmatpush2.msra.mxu0 0.0
    %268 = vmatprep.subr.mxu0 0.0
    %269 = vmatpush2.msra.mxu0 0.0
    %270 = vmatprep.subr.mxu0 0.0
    %271 = vmatpush2.msra.mxu0 0.0
    %272 = vmatprep.subr.mxu0 0.0
    %273 = vmatpush2.msra.mxu0 0.0
    %274 = vmatprep.subr.mxu0 0.0
    %275 = vmatpush2.msra.mxu0 0.0
    %276 = vmatprep.subr.mxu0 0.0
    %277 = vmatpush2.msra.mxu0 0.0
    %278 = vmatprep.subr.mxu0 0.0
    %279 = vmatpush2.msra.mxu0 0.0
    %280 = vmatprep.subr.mxu0 0.0
    %281 = vmatpush2.msra.mxu0 0.0
    %282 = vmatprep.subr.mxu0 0.0
    %283 = vmatpush2.msra.mxu0 0.0
    %284 = vmatprep.subr.mxu0 0.0
    %285 = vmatpush2.msra.mxu0 0.0
    %286 = vmatprep.subr.mxu0 0.0
    %287 = vmatpush2.msra.mxu0 0.0
    %288 = vmatprep.subr.mxu0 0.0
    %289 = vmatpush2.msra.mxu0 0.0
    %290 = vmatprep.subr.mxu0 0.0
    %291 = vmatpush2.msra.mxu0 0.0
    %292 = vmatprep.subr.mxu0 0.0
    %293 = vmatpush2.msra.mxu0 0.0
    %294 = vmatprep.mubr.f32.mxu0 0.0
    %295 = vmatmul.mubr.f32.gmra.mxu0 %v228
    %v296 = vpop.f32.mrf.mxu0
    %v297 = vadd.f32 %v225, %v296
    %v298 = vpop.f32.mrf.mxu0
    %299 = vdwg.mxu0
    %vm300 = vcmask 130048
    %v301 = vsel %vm300, %v297, -inf
    %302 = vmax.xlane.f32.xlu0 %v301
    %v303 = vpop.xlane.xlu0 %302
    %v304 = vsub.f32 %v297, %v303
    %v305 = vmul.f32 %v304, 1.442695
    %v306 = vpow.pop %v305
    %v307 = vsel %vm300, %v306, 0.0
    %308 = vadd.xlane.f32.xlu0 %v307
    %v309 = vpop.xlane.xlu0 %308
    %v310 = vlog2.pop %v309
    %v311 = vmul.f32 %v310, 0.6931472
    %v312 = vsub.f32 %v304, %v311
    %v313 = vmul.f32 %v312, 1.442695
    %v314 = vpow.pop %v313
    %315 = vst.msk [vmem:[#allocation5] sm:$0xff] %vm300, %v314
    %316 = vst.msk [vmem:[#allocation6] sm:$0xff] %vm300, %v312
    // Predicated region
    $region34: #{tpu_custom_call.1} parent=1 // pred_check
      _
    $region35: #{tpu_custom_call.1} parent=1 // pred_check_branch
      %318 = sbr.rel (0) target = $region37
    $region36: #{tpu_custom_call.1} parent=1 // pred_region
      %s320 = ssub.s32 128, 128
      %321 = vsyncadd [#allocation4], %s320
      %s323 = sshll.u32 [#allocation5], 4
      %s324 = int_to_ptr.vmem [resolvable:$true] %s323
      %326 = dma.vmem_to_hbm [thread:$0]  %s324, 128, %s7, [#allocation4]
    $region37: #{tpu_custom_call.1} parent=1 // pred_fallthru
      _
    // Predicated region
    $region38: #{tpu_custom_call.1} parent=1 // pred_check
      _
    $region39: #{tpu_custom_call.1} parent=1 // pred_check_branch
      %328 = sbr.rel (0) target = $region41
    $region40: #{tpu_custom_call.1} parent=1 // pred_region
      %s330 = ssub.s32 128, 128
      %331 = vsyncadd [#allocation7], %s330
      %s333 = sshll.u32 [#allocation6], 4
      %s334 = int_to_ptr.vmem [resolvable:$true] %s333
      %336 = dma.vmem_to_hbm [thread:$0]  %s334, 128, %s8, [#allocation7]
    $region41: #{tpu_custom_call.1} parent=1 // pred_fallthru
      _
    // Predicated region
    $region42: #{tpu_custom_call.1} parent=1 // pred_check
      _
    $region43: #{tpu_custom_call.1} parent=1 // pred_check_branch
      %338 = sbr.rel (0) target = $region45
    $region44: #{tpu_custom_call.1} parent=1 // pred_region
      %339 = dma.done [#allocation4], 128
    $region45: #{tpu_custom_call.1} parent=1 // pred_fallthru
      _
    // Predicated region
    $region46: #{tpu_custom_call.1} parent=1 // pred_check
      _
    $region47: #{tpu_custom_call.1} parent=1 // pred_check_branch
      %341 = sbr.rel (0) target = $region49
    $region48: #{tpu_custom_call.1} parent=1 // pred_region
      %342 = dma.done [#allocation7], 128
    $region49: #{tpu_custom_call.1} parent=1 // pred_fallthru
      _
    %343 = vsyncpa [#allocation3], 1
    %344 = vsyncpa [#allocation4], 1
    %345 = vsyncpa [#allocation7], 1

</llo_original>
